<compile_context>
chip_gen: v5e
topology: v5e:2x2
jax: 0.10.0
libtpu: 0.0.40
codegen_flags: <defaults>
</compile_context>

<pallas_src>
import jax
import jax.numpy as jnp
from jax import lax
from jax.experimental import pallas as pl
from jax.experimental.pallas import tpu as pltpu


def _conv_bn_act_kernel(x_ref, w_ref, scale_ref, bias_ref, o_ref):
    """One grid step = TM output pixels x all (padded) output channels.

    x_ref    : (TM, 9*C)    bf16 im2col rows
    w_ref    : (9*C, OCp)   bf16 conv weights, OCp = out channels padded to 128
    scale_ref: (1, OCp)     f32 folded BN scale
    bias_ref : (1, OCp)     f32 folded BN bias
    o_ref    : (TM, OCp)    f32 output rows (lane-dense)
    """
    acc = jnp.dot(x_ref[...], w_ref[...], preferred_element_type=jnp.float32)
    y = acc * scale_ref[...] + bias_ref[...]                 # BN (inference, folded)
    o_ref[...] = jnp.maximum(y, 0.0).astype(o_ref.dtype)     # ReLU


def conv_bn_act(x_nchw, w_oihw, gamma, beta, running_mean, running_var,
                eps=1e-5, *, tm=128):
    """ConvBnAct forward. x_nchw: (N, C, H, W). Returns (N, OC, H, W)."""
    N, C, H, W = x_nchw.shape
    OC = w_oihw.shape[0]
    K = 9 * C
    LANE = 128
    OCp = ((OC + LANE - 1) // LANE) * LANE

    # ---- glue (plain JAX): layout, spatial pad, im2col, BN fold ----
    x_nhwc = jnp.transpose(x_nchw, (0, 2, 3, 1))                       # (N,H,W,C)
    xp = jnp.pad(x_nhwc, ((0, 0), (1, 1), (1, 1), (0, 0)))             # p=1
    taps = [xp[:, dy:dy + H, dx:dx + W, :]
            for dy in range(3) for dx in range(3)]                     # 9 x (N,H,W,C)
    x_col = jnp.concatenate(taps, axis=-1).reshape(N * H * W, K)       # (M, 9C)
    x_col = x_col.astype(jnp.bfloat16)

    M = N * H * W
    Mp = ((M + tm - 1) // tm) * tm
    if Mp != M:
        x_col = jnp.pad(x_col, ((0, Mp - M), (0, 0)))

    # (OC, C, 3, 3) -> (dy, dx, C, OC) -> (9C, OC): row index = (dy*3+dx)*C + c,
    # matching the tap concat order above.  Pad OC -> OCp for lane density.
    w2 = jnp.transpose(w_oihw, (2, 3, 1, 0)).reshape(K, OC)
    w2 = jnp.pad(w2, ((0, 0), (0, OCp - OC))).astype(jnp.bfloat16)

    scale = gamma / jnp.sqrt(running_var + eps)
    bias = beta - running_mean * scale
    scale = jnp.pad(scale, (0, OCp - OC)).reshape(1, OCp).astype(jnp.float32)
    bias = jnp.pad(bias, (0, OCp - OC)).reshape(1, OCp).astype(jnp.float32)

    cost = pl.CostEstimate(
        flops=2 * M * K * OC,
        transcendentals=0,
        bytes_accessed=Mp * K * 2 + K * OCp * 2 + 2 * OCp * 4 + Mp * OCp * 4,
    )

    out = pl.pallas_call(
        _conv_bn_act_kernel,
        out_shape=jax.ShapeDtypeStruct((Mp, OCp), jnp.float32),
        grid_spec=pltpu.PrefetchScalarGridSpec(
            num_scalar_prefetch=0,
            grid=(Mp // tm,),
            in_specs=[
                pl.BlockSpec((tm, K), lambda i: (i, 0)),        # im2col rows
                pl.BlockSpec((K, OCp), lambda i: (0, 0)),       # weights (resident)
                pl.BlockSpec((1, OCp), lambda i: (0, 0)),       # BN scale
                pl.BlockSpec((1, OCp), lambda i: (0, 0)),       # BN bias
            ],
            out_specs=pl.BlockSpec((tm, OCp), lambda i: (i, 0)),
        ),
        compiler_params=pltpu.CompilerParams(
            dimension_semantics=("parallel",),
            vmem_limit_bytes=32 * 1024 * 1024,   # per-step footprint is << 1 MiB
        ),
        cost_estimate=cost,
    )(x_col, w2, scale, bias)

    out = out[:M, :OC].reshape(N, H, W, OC)
    return jnp.transpose(out, (0, 3, 1, 2)).astype(x_nchw.dtype)       # back to NCHW


def _reference(x_nchw, w_oihw, gamma, beta, running_mean, running_var, eps=1e-5):
    y = lax.conv_general_dilated(
        x_nchw.astype(jnp.float32), w_oihw.astype(jnp.float32),
        window_strides=(1, 1), padding=((1, 1), (1, 1)),
        dimension_numbers=("NCHW", "OIHW", "NCHW"))
    scale = gamma / jnp.sqrt(running_var + eps)
    bias = beta - running_mean * scale
    y = y * scale[None, :, None, None] + bias[None, :, None, None]
    return jnp.maximum(y, 0.0)


if __name__ == "__main__":
    key = jax.random.PRNGKey(0)
    k_x, k_w, k_g, k_b, k_m, k_v = jax.random.split(key, 6)

    in_c, out_c = 4, 8
    N, H, W = 2, 16, 16

    x = jax.random.normal(k_x, (N, in_c, H, W), dtype=jnp.float32)
    w = jax.random.normal(k_w, (out_c, in_c, 3, 3), dtype=jnp.float32) * 0.1
    gamma = 1.0 + 0.1 * jax.random.normal(k_g, (out_c,), dtype=jnp.float32)
    beta = 0.1 * jax.random.normal(k_b, (out_c,), dtype=jnp.float32)
    running_mean = 0.1 * jax.random.normal(k_m, (out_c,), dtype=jnp.float32)
    running_var = jnp.abs(1.0 + 0.1 * jax.random.normal(k_v, (out_c,),
                                                        dtype=jnp.float32))

    out = conv_bn_act(x, w, gamma, beta, running_mean, running_var)
    out = jax.block_until_ready(out)

    ref = _reference(x, w, gamma, beta, running_mean, running_var)
    assert out.shape == (N, out_c, H, W)
    # bf16 matmul operands (f32 accumulation) -> loosen tolerance vs pure-f32 ref.
    assert jnp.allclose(out, ref, atol=3e-2, rtol=3e-2), \
        f"max abs err = {jnp.max(jnp.abs(out - ref))}"

    print("KERNEL_OK")
</pallas_src>

<mosaic_0001>
module attributes {stable_mosaic.version = 11 : i64} {
  func.func @_conv_bn_act_kernel(%arg0: i32, %arg1: memref<128x36xbf16, #tpu.memory_space<vmem>>, %arg2: memref<36x128xbf16, #tpu.memory_space<vmem>>, %arg3: memref<1x128xf32, #tpu.memory_space<vmem>>, %arg4: memref<1x128xf32, #tpu.memory_space<vmem>>, %arg5: memref<128x128xf32, #tpu.memory_space<vmem>>) attributes {dimension_semantics = [#tpu.dimension_semantics<parallel>], iteration_bounds = array<i64: 4>, scalar_prefetch = 0 : i64, scratch_operands = 0 : i64, tpu.core_type = #tpu.core_type<tc>, window_params = [{transform_indices = @transform_0, window_bounds = array<i64: 128, 36>}, {pipeline_mode = #tpu.pipeline_mode<synchronous>, transform_indices = @transform_1, window_bounds = array<i64: 36, 128>}, {pipeline_mode = #tpu.pipeline_mode<synchronous>, transform_indices = @transform_2, window_bounds = array<i64: 1, 128>}, {pipeline_mode = #tpu.pipeline_mode<synchronous>, transform_indices = @transform_3, window_bounds = array<i64: 1, 128>}, {transform_indices = @transform_4, window_bounds = array<i64: 128, 128>}]} {
    %c0 = arith.constant 0 : index
    %c0_0 = arith.constant 0 : index
    %0 = vector.load %arg1[%c0, %c0_0] : memref<128x36xbf16, #tpu.memory_space<vmem>>, vector<128x36xbf16>
    %c0_1 = arith.constant 0 : index
    %c0_2 = arith.constant 0 : index
    %1 = vector.load %arg2[%c0_1, %c0_2] : memref<36x128xbf16, #tpu.memory_space<vmem>>, vector<36x128xbf16>
    %cst = arith.constant dense<0.000000e+00> : vector<128x128xf32>
    %2 = tpu.matmul %0, %1, %cst {dimension_numbers = #tpu.dot_dimension_numbers<[1], [0], [0], [1], [0, 0, 1, 1], [], []>} : vector<128x36xbf16>, vector<36x128xbf16>, vector<128x128xf32> -> vector<128x128xf32>
    %c0_3 = arith.constant 0 : index
    %c0_4 = arith.constant 0 : index
    %3 = vector.load %arg3[%c0_3, %c0_4] : memref<1x128xf32, #tpu.memory_space<vmem>>, vector<1x128xf32>
    %4 = vector.broadcast %3 : vector<1x128xf32> to vector<128x128xf32>
    %5 = arith.mulf %2, %4 : vector<128x128xf32>
    %c0_5 = arith.constant 0 : index
    %c0_6 = arith.constant 0 : index
    %6 = vector.load %arg4[%c0_5, %c0_6] : memref<1x128xf32, #tpu.memory_space<vmem>>, vector<1x128xf32>
    %7 = vector.broadcast %6 : vector<1x128xf32> to vector<128x128xf32>
    %8 = arith.addf %5, %7 : vector<128x128xf32>
    %cst_7 = arith.constant 0.000000e+00 : f32
    %9 = vector.broadcast %cst_7 : f32 to vector<128x128xf32>
    %10 = arith.maximumf %8, %9 : vector<128x128xf32>
    %c0_8 = arith.constant 0 : index
    %c0_9 = arith.constant 0 : index
    %11 = vector.load %arg5[%c0_8, %c0_9] : memref<128x128xf32, #tpu.memory_space<vmem>>, vector<128x128xf32>
    tpu.vector_store %arg5[%c0_8, %c0_9], %10 {strides = array<i32>} : memref<128x128xf32, #tpu.memory_space<vmem>>, vector<128x128xf32>,
    return
  }
  func.func @transform_0(%arg0: i32) -> (i32, i32) {
    %c0_i32 = arith.constant 0 : i32
    %c0_i32_0 = arith.constant 0 : i32
    return %arg0, %c0_i32 : i32, i32
  }
  func.func @transform_1(%arg0: i32) -> (i32, i32) {
    %c0_i32 = arith.constant 0 : i32
    %c0_i32_0 = arith.constant 0 : i32
    %c0_i32_1 = arith.constant 0 : i32
    return %c0_i32, %c0_i32_0 : i32, i32
  }
  func.func @transform_2(%arg0: i32) -> (i32, i32) {
    %c0_i32 = arith.constant 0 : i32
    %c0_i32_0 = arith.constant 0 : i32
    %c0_i32_1 = arith.constant 0 : i32
    return %c0_i32, %c0_i32_0 : i32, i32
  }
  func.func @transform_3(%arg0: i32) -> (i32, i32) {
    %c0_i32 = arith.constant 0 : i32
    %c0_i32_0 = arith.constant 0 : i32
    %c0_i32_1 = arith.constant 0 : i32
    return %c0_i32, %c0_i32_0 : i32, i32
  }
  func.func @transform_4(%arg0: i32) -> (i32, i32) {
    %c0_i32 = arith.constant 0 : i32
    %c0_i32_0 = arith.constant 0 : i32
    return %arg0, %c0_i32 : i32, i32
  }
}

</mosaic_0001>

<llo_original>
// kernel: tpu_custom_call.1
$region0: #{tpu_custom_call.1}
  #allocation0 [shape = 'u32[]', space=smem, size = 0x4, offset = 0x4, fixed_abs, tag = 'smem constant byte address 0x4 - core index']
  #allocation1 [shape = 'u32[72,128]{1,0:T(1,128)}', space=vmem, size = 0x9000, scoped, tag = 'internal scratch']
  %s0 = inlined_call_operand.vmem [shape: bf16[512,36], index: 0, kind: input, shape index: {}]
  %s1 = inlined_call_operand.vmem [shape: bf16[36,128], index: 1, kind: input, shape index: {}]
  %s2 = inlined_call_operand.vmem [shape: f32[1,128], index: 2, kind: input, shape index: {}]
  %s3 = inlined_call_operand.vmem [shape: f32[1,128], index: 3, kind: input, shape index: {}]
  %s4 = inlined_call_operand.hbm [shape: f32[512,128], index: 4, kind: output, shape index: {}]
  %s5 = sld [smem:[#allocation0]]
  $region49: #{tpu_custom_call.1} parent=0
    _
  %s7 = ssub.s32 1, %s5
  %s8 = scalar_select 0, %s7, %s5
  $region1: #{tpu_custom_call.1} parent=0
    #allocation2 [shape = 'u8[131072]{0}', space=vmem, size = 0x20000, scoped, tag = 'output window, operand 0']
    #allocation3 [shape = 's32[2]{0}', space=sflag, size = 0x8, scoped, tag = 'scoped memory for tpu_custom_call.1']
    %9 = vsyncpa [#allocation3], 0
    %s10 = scalar_lea.sflag [#allocation3], 1
    %11 = vsyncpa %s10, 0
    loop: start=0, step=1, limit=6
    $region2: #{tpu_custom_call.1} parent=1 // loop_pre_header
      _
    $region3: #{tpu_custom_call.1} parent=1 // loop_header
      %s13 = sphi 0, %s17
      %p14 = scmp.ge.s32.totalorder %s13, 6
      %s23 = sphi 0, %s25
      %s26 = sphi 0, %s23
      %s27 = sphi 0, %s26
      %s43 = sphi 0, %s27
      %s47 = sphi 0, %s47
      %s49 = sphi 0, %s47
      %s50 = sphi 0, %s49
      %s64 = sphi 0, %s50
      %s68 = sphi 0, %s68
      %s70 = sphi 0, %s68
      %s71 = sphi 0, %s70
      %s85 = sphi 0, %s71
      %s89 = sphi 0, %s89
      %s91 = sphi 0, %s89
      %s92 = sphi 0, %s91
      %s106 = sphi 0, %s92
      %s112 = sphi 0, %s114
      %s115 = sphi 0, %s112
      %s116 = sphi 0, %s115
      %s132 = sphi 0, %s116
    $region4: #{tpu_custom_call.1} parent=1 // loop_header_branch
      %16 = sbr.rel (%p14) target = $region8
    $region5: #{tpu_custom_call.1} parent=1 // loop_body
      %s18 = ssub.s32 %s13, 1
      %s19 = ssub.s32 %s13, 2
      %s20 = sadd.s32 %s13, 1
      %s21 = ssub.s32 %s13, %s20
      %p22 = scmp.eq.s32.totalorder %s21, 0
      %s24 = sadd.s32 %s23, 1
      %s25 = scalar_select %p22, %s23, %s24
      %p28 = pneg %p22
      %p29 = scmp.eq.s32.totalorder %s13, 3
      %p30 = por %p28, %p29
      %p31 = scmp.ne.s32.totalorder %s23, %s26
      %p32 = scmp.eq.s32.totalorder %s13, 0
      %p33 = por %p31, %p32
      %p34 = scmp.ne.s32.totalorder %s23, %s26
      %p35 = scmp.eq.s32.totalorder %s18, 3
      %p36 = por %p34, %p35
      %p37 = scmp.ne.s32.totalorder %s26, %s27
      %p38 = scmp.eq.s32.totalorder %s18, 0
      %p39 = por %p37, %p38
      %p40 = scmp.ne.s32.totalorder %s26, %s27
      %p41 = scmp.eq.s32.totalorder %s19, 3
      %p42 = por %p40, %p41
      %p44 = scmp.ne.s32.totalorder %s27, %s43
      %p45 = scmp.eq.s32.totalorder %s19, 0
      %p46 = por %p44, %p45
      %s48 = sadd.s32 %s47, 1
      %p51 = scmp.eq.s32.totalorder %s13, 3
      %p52 = scmp.ne.s32.totalorder %s47, %s49
      %p53 = scmp.eq.s32.totalorder %s13, 0
      %p54 = por %p52, %p53
      %p55 = scmp.ne.s32.totalorder %s47, %s49
      %p56 = scmp.eq.s32.totalorder %s18, 3
      %p57 = por %p55, %p56
      %p58 = scmp.ne.s32.totalorder %s49, %s50
      %p59 = scmp.eq.s32.totalorder %s18, 0
      %p60 = por %p58, %p59
      %p61 = scmp.ne.s32.totalorder %s49, %s50
      %p62 = scmp.eq.s32.totalorder %s19, 3
      %p63 = por %p61, %p62
      %p65 = scmp.ne.s32.totalorder %s50, %s64
      %p66 = scmp.eq.s32.totalorder %s19, 0
      %p67 = por %p65, %p66
      %s69 = sadd.s32 %s68, 1
      %p72 = scmp.eq.s32.totalorder %s13, 3
      %p73 = scmp.ne.s32.totalorder %s68, %s70
      %p74 = scmp.eq.s32.totalorder %s13, 0
      %p75 = por %p73, %p74
      %p76 = scmp.ne.s32.totalorder %s68, %s70
      %p77 = scmp.eq.s32.totalorder %s18, 3
      %p78 = por %p76, %p77
      %p79 = scmp.ne.s32.totalorder %s70, %s71
      %p80 = scmp.eq.s32.totalorder %s18, 0
      %p81 = por %p79, %p80
      %p82 = scmp.ne.s32.totalorder %s70, %s71
      %p83 = scmp.eq.s32.totalorder %s19, 3
      %p84 = por %p82, %p83
      %p86 = scmp.ne.s32.totalorder %s71, %s85
      %p87 = scmp.eq.s32.totalorder %s19, 0
      %p88 = por %p86, %p87
      %s90 = sadd.s32 %s89, 1
      %p93 = scmp.eq.s32.totalorder %s13, 3
      %p94 = scmp.ne.s32.totalorder %s89, %s91
      %p95 = scmp.eq.s32.totalorder %s13, 0
      %p96 = por %p94, %p95
      %p97 = scmp.ne.s32.totalorder %s89, %s91
      %p98 = scmp.eq.s32.totalorder %s18, 3
      %p99 = por %p97, %p98
      %p100 = scmp.ne.s32.totalorder %s91, %s92
      %p101 = scmp.eq.s32.totalorder %s18, 0
      %p102 = por %p100, %p101
      %p103 = scmp.ne.s32.totalorder %s91, %s92
      %p104 = scmp.eq.s32.totalorder %s19, 3
      %p105 = por %p103, %p104
      %p107 = scmp.ne.s32.totalorder %s92, %s106
      %p108 = scmp.eq.s32.totalorder %s19, 0
      %p109 = por %p107, %p108
      %s110 = ssub.s32 %s13, %s20
      %p111 = scmp.eq.s32.totalorder %s110, 0
      %s113 = sadd.s32 %s112, 1
      %s114 = scalar_select %p111, %s112, %s113
      %p117 = pneg %p111
      %p118 = scmp.eq.s32.totalorder %s13, 3
      %p119 = por %p117, %p118
      %p120 = scmp.ne.s32.totalorder %s112, %s115
      %p121 = scmp.eq.s32.totalorder %s13, 0
      %p122 = por %p120, %p121
      %p123 = scmp.ne.s32.totalorder %s112, %s115
      %p124 = scmp.eq.s32.totalorder %s18, 3
      %p125 = por %p123, %p124
      %p126 = scmp.ne.s32.totalorder %s115, %s116
      %p127 = scmp.eq.s32.totalorder %s18, 0
      %p128 = por %p126, %p127
      %p129 = scmp.ne.s32.totalorder %s115, %s116
      %p130 = scmp.eq.s32.totalorder %s19, 3
      %p131 = por %p129, %p130
      %p133 = scmp.ne.s32.totalorder %s116, %s132
      %p134 = scmp.eq.s32.totalorder %s19, 0
      %p135 = por %p133, %p134
      %p136 = scmp.le.s32.totalorder 1, %s13
      %p137 = scmp.lt.s32.totalorder %s13, 5
      %p138 = pnand %p136, %p137
      %p139 = pneg %p138
      // Predicated region
      $region9: #{tpu_custom_call.1} parent=5 // pred_check
        _
      $region10: #{tpu_custom_call.1} parent=5 // pred_check_branch
        %141 = sbr.rel (%p138) target = $region12
      $region11: #{tpu_custom_call.1} parent=5 // pred_region
        %s142 = ssub.s32 %s13, 1
        // Predicated region
        $region13: #{tpu_custom_call.1} parent=11 // pred_check
          %p143 = pneg %p60
        $region14: #{tpu_custom_call.1} parent=11 // pred_check_branch
          %145 = sbr.rel (%p143) target = $region16
        $region15: #{tpu_custom_call.1} parent=11 // pred_region
          _
        $region16: #{tpu_custom_call.1} parent=11 // pred_fallthru
          _
        // Predicated region
        $region17: #{tpu_custom_call.1} parent=11 // pred_check
          %p146 = pneg %p81
        $region18: #{tpu_custom_call.1} parent=11 // pred_check_branch
          %148 = sbr.rel (%p146) target = $region20
        $region19: #{tpu_custom_call.1} parent=11 // pred_region
          _
        $region20: #{tpu_custom_call.1} parent=11 // pred_fallthru
          _
        // Predicated region
        $region21: #{tpu_custom_call.1} parent=11 // pred_check
          %p149 = pneg %p102
        $region22: #{tpu_custom_call.1} parent=11 // pred_check_branch
          %151 = sbr.rel (%p149) target = $region24
        $region23: #{tpu_custom_call.1} parent=11 // pred_region
          _
        $region24: #{tpu_custom_call.1} parent=11 // pred_fallthru
          _
      $region12: #{tpu_custom_call.1} parent=5 // pred_fallthru
        _
      %p152 = scmp.lt.s32.totalorder %s13, 4
      // Predicated region
      $region25: #{tpu_custom_call.1} parent=5 // pred_check
        %p153 = pneg %p152
      $region26: #{tpu_custom_call.1} parent=5 // pred_check_branch
        %155 = sbr.rel (%p153) target = $region28
      $region27: #{tpu_custom_call.1} parent=5 // pred_region
        // Predicated region
        $region29: #{tpu_custom_call.1} parent=27 // pred_check
          %p156 = pneg %p33
        $region30: #{tpu_custom_call.1} parent=27 // pred_check_branch
          %158 = sbr.rel (%p156) target = $region32
        $region31: #{tpu_custom_call.1} parent=27 // pred_region
          %s159 = smul.u32 16, %s13
          %p160 = scmp.lt.s32.totalorder %s159, 63
          %s161 = scalar_select %p160, %s159, 63
          %s162 = smul.addr %s161, 4
          %s163 = scalar_lea.vmem %s0, %s162
          %s164 = smul.u32 16, %s13
        $region32: #{tpu_custom_call.1} parent=27 // pred_fallthru
          _
      $region28: #{tpu_custom_call.1} parent=5 // pred_fallthru
        _
      %p165 = scmp.le.s32.totalorder 1, %s13
      %p166 = scmp.lt.s32.totalorder %s13, 5
      %p167 = pnand %p165, %p166
      %p168 = pneg %p167
      // Predicated region
      $region33: #{tpu_custom_call.1} parent=5 // pred_check
        _
      $region34: #{tpu_custom_call.1} parent=5 // pred_check_branch
        %170 = sbr.rel (%p167) target = $region36
      $region35: #{tpu_custom_call.1} parent=5 // pred_region
        %s171 = ssub.s32 %s13, 1
        %s172 = smul.u32 16, %s18
        %p173 = scmp.lt.s32.totalorder %s172, 63
        %s174 = scalar_select %p173, %s172, 63
        %s175 = smul.addr %s174, 4
        %s176 = scalar_lea.vmem %s0, %s175
        %p177 = pneg %p39
        %p178 = pneg %p36
        %p179 = pneg %p60
        %p180 = pneg %p57
        %p181 = pneg %p81
        %p182 = pneg %p78
        %p183 = pneg %p102
        %p184 = pneg %p99
        %p185 = pneg %p128
        %p186 = pneg %p125
        %s187 = sand.u32 %s115, 1
        %s188 = scalar_lea.sflag [#allocation3], %s187
        %s189 = sand.u32 %s115, 1
        %s190 = smul.addr %s189, 128
        %s191 = scalar_lea.vmem [#allocation2], %s190
        %s192 = smul.u32 16, %s18
        %p193 = scmp.lt.s32.totalorder %s192, 63
        %s194 = scalar_select %p193, %s192, 63
        %s195 = smul.addr %s194, 4
        %s196 = scalar_lea.vmem %s0, %s195
        %s197 = smul.u32 16, %s18
        %s198 = smul.u32 16, %s18
        %v200 = vld [vmem:[%s196] sm:$0xf]
        %v201 = vld [vmem:[%s196 + $0x4] sm:$0xf]
        %v202 = vld [vmem:[%s196 + $0x8] sm:$0xf]
        %v203 = vld [vmem:[%s196 + $0xc] sm:$0xf]
        %v204 = vld [vmem:[%s196 + $0x10] sm:$0xf]
        %v205 = vld [vmem:[%s196 + $0x14] sm:$0xf]
        %v206 = vld [vmem:[%s196 + $0x18] sm:$0xf]
        %v207 = vld [vmem:[%s196 + $0x1c] sm:$0xf]
        %v208 = vld [vmem:[%s196 + $0x20] sm:$0xf]
        %v209 = vld [vmem:[%s196 + $0x24] sm:$0xf]
        %v210 = vld [vmem:[%s196 + $0x28] sm:$0xf]
        %v211 = vld [vmem:[%s196 + $0x2c] sm:$0xf]
        %v212 = vld [vmem:[%s196 + $0x30] sm:$0xf]
        %v213 = vld [vmem:[%s196 + $0x34] sm:$0xf]
        %v214 = vld [vmem:[%s196 + $0x38] sm:$0xf]
        %v215 = vld [vmem:[%s196 + $0x3c] sm:$0xf]
        %v216 = vld [vmem:[%s1] sm:$0xf]
        %v217 = vld [vmem:[%s1 + $0x4] sm:$0xf]
        %v218 = vld [vmem:[%s1 + $0x8] sm:$0xf]
        %v219 = vld [vmem:[%s1 + $0xc] sm:$0xf]
        %v220 = vld [vmem:[%s1 + $0x10] sm:$0x3]
        %v237 = vunpack.c.l.b16 %v200
        %v238 = vunpack.c.l.b16 %v201
        %v239 = vunpack.c.l.b16 %v202
        %v240 = vunpack.c.l.b16 %v203
        %v241 = vunpack.c.l.b16 %v204
        %v242 = vunpack.c.l.b16 %v205
        %v243 = vunpack.c.l.b16 %v206
        %v244 = vunpack.c.l.b16 %v207
        %v245 = vunpack.c.l.b16 %v208
        %v246 = vunpack.c.l.b16 %v209
        %v247 = vunpack.c.l.b16 %v210
        %v248 = vunpack.c.l.b16 %v211
        %v249 = vunpack.c.l.b16 %v212
        %v250 = vunpack.c.l.b16 %v213
        %v251 = vunpack.c.l.b16 %v214
        %v252 = vunpack.c.l.b16 %v215
        %v253 = vpack.c.b16 %v238, %v237
        %v254 = vpack.c.b16 %v240, %v239
        %v255 = vpack.c.b16 %v242, %v241
        %v256 = vpack.c.b16 %v244, %v243
        %v257 = vpack.c.b16 %v246, %v245
        %v258 = vpack.c.b16 %v248, %v247
        %v259 = vpack.c.b16 %v250, %v249
        %v260 = vpack.c.b16 %v252, %v251
        %v266 = vunpack.c.l.b16 %v216
        %v267 = vunpack.c.l.b16 %v217
        %v268 = vunpack.c.l.b16 %v218
        %v269 = vunpack.c.l.b16 %v219
        %v270 = vunpack.c.l.b16 %v220
        %v271 = vpack.c.b16 %v267, %v266
        %v272 = vpack.c.b16 %v269, %v268
        %v273 = vpack.c.b16 %v270, %v270
        %vm276 = vcmask 293888
        %v278 = vsel %vm276, %v253, 0
        %v281 = vsel %vm276, %v254, 0
        %v284 = vsel %vm276, %v255, 0
        %v287 = vsel %vm276, %v256, 0
        %v290 = vsel %vm276, %v257, 0
        %v293 = vsel %vm276, %v258, 0
        %v296 = vsel %vm276, %v259, 0
        %v299 = vsel %vm276, %v260, 0
        %vm301 = vcmask 1041408
        %v303 = vsel %vm301, %v273, 0
        %305 = vmatpush.bf16.msra.mxu0 0
        %306 = vmatpush.bf16.msra.mxu0 0
        %307 = vmatpush.bf16.msra.mxu0 0
        %308 = vmatpush.bf16.msra.mxu0 0
        %309 = vmatpush.bf16.msra.mxu0 0
        %310 = vmatpush.bf16.msra.mxu0 %v303
        %311 = vmatpush.bf16.msra.mxu0 %v272
        %312 = vmatpush.bf16.msra.mxu0 %v271
        %313 = vmatmul.bf16.gmra.mxu0 %v278
        %v314 = vpop.f32.mrf.mxu0
        %v315 = vadd.f32 0.0, %v314
        %v316 = vpop.f32.mrf.mxu0
        %v317 = vadd.f32 0.0, %v316
        %318 = vmatmul.bf16.gmra.mxu0 %v281
        %v319 = vpop.f32.mrf.mxu0
        %v320 = vadd.f32 0.0, %v319
        %v321 = vpop.f32.mrf.mxu0
        %v322 = vadd.f32 0.0, %v321
        %323 = vmatmul.bf16.gmra.mxu0 %v284
        %v324 = vpop.f32.mrf.mxu0
        %v325 = vadd.f32 0.0, %v324
        %v326 = vpop.f32.mrf.mxu0
        %v327 = vadd.f32 0.0, %v326
        %328 = vmatmul.bf16.gmra.mxu0 %v287
        %v329 = vpop.f32.mrf.mxu0
        %v330 = vadd.f32 0.0, %v329
        %v331 = vpop.f32.mrf.mxu0
        %v332 = vadd.f32 0.0, %v331
        %333 = vmatmul.bf16.gmra.mxu0 %v290
        %v334 = vpop.f32.mrf.mxu0
        %v335 = vadd.f32 0.0, %v334
        %v336 = vpop.f32.mrf.mxu0
        %v337 = vadd.f32 0.0, %v336
        %338 = vmatmul.bf16.gmra.mxu0 %v293
        %v339 = vpop.f32.mrf.mxu0
        %v340 = vadd.f32 0.0, %v339
        %v341 = vpop.f32.mrf.mxu0
        %v342 = vadd.f32 0.0, %v341
        %343 = vmatmul.bf16.gmra.mxu0 %v296
        %v344 = vpop.f32.mrf.mxu0
        %v345 = vadd.f32 0.0, %v344
        %v346 = vpop.f32.mrf.mxu0
        %v347 = vadd.f32 0.0, %v346
        %348 = vmatmul.bf16.gmra.mxu0 %v299
        %v349 = vpop.f32.mrf.mxu0
        %v350 = vadd.f32 0.0, %v349
        %v351 = vpop.f32.mrf.mxu0
        %v352 = vadd.f32 0.0, %v351
        %353 = vdwg.mxu0
        %v354 = vld [vmem:[%s2] sm:$0x1]
        %v356 = vperm.slane %v354, 0
        %v358 = vmul.f32 %v315, %v356
        %v359 = vmul.f32 %v317, %v356
        %v360 = vmul.f32 %v320, %v356
        %v361 = vmul.f32 %v322, %v356
        %v362 = vmul.f32 %v325, %v356
        %v363 = vmul.f32 %v327, %v356
        %v364 = vmul.f32 %v330, %v356
        %v365 = vmul.f32 %v332, %v356
        %v366 = vmul.f32 %v335, %v356
        %v367 = vmul.f32 %v337, %v356
        %v368 = vmul.f32 %v340, %v356
        %v369 = vmul.f32 %v342, %v356
        %v370 = vmul.f32 %v345, %v356
        %v371 = vmul.f32 %v347, %v356
        %v372 = vmul.f32 %v350, %v356
        %v373 = vmul.f32 %v352, %v356
        %v374 = vld [vmem:[%s3] sm:$0x1]
        %v376 = vperm.slane %v374, 0
        %v378 = vadd.f32 %v358, %v376
        %v379 = vadd.f32 %v359, %v376
        %v380 = vadd.f32 %v360, %v376
        %v381 = vadd.f32 %v361, %v376
        %v382 = vadd.f32 %v362, %v376
        %v383 = vadd.f32 %v363, %v376
        %v384 = vadd.f32 %v364, %v376
        %v385 = vadd.f32 %v365, %v376
        %v386 = vadd.f32 %v366, %v376
        %v387 = vadd.f32 %v367, %v376
        %v388 = vadd.f32 %v368, %v376
        %v389 = vadd.f32 %v369, %v376
        %v390 = vadd.f32 %v370, %v376
        %v391 = vadd.f32 %v371, %v376
        %v392 = vadd.f32 %v372, %v376
        %v393 = vadd.f32 %v373, %v376
        %v394 = vmax.f32 %v378, 0.0
        %v395 = vmax.f32 %v379, 0.0
        %v396 = vmax.f32 %v380, 0.0
        %v397 = vmax.f32 %v381, 0.0
        %v398 = vmax.f32 %v382, 0.0
        %v399 = vmax.f32 %v383, 0.0
        %v400 = vmax.f32 %v384, 0.0
        %v401 = vmax.f32 %v385, 0.0
        %v402 = vmax.f32 %v386, 0.0
        %v403 = vmax.f32 %v387, 0.0
        %v404 = vmax.f32 %v388, 0.0
        %v405 = vmax.f32 %v389, 0.0
        %v406 = vmax.f32 %v390, 0.0
        %v407 = vmax.f32 %v391, 0.0
        %v408 = vmax.f32 %v392, 0.0
        %v409 = vmax.f32 %v393, 0.0
        %410 = vst [vmem:[%s191] sm:$0xff] %v394
        %411 = vst [vmem:[%s191 + $0x8] sm:$0xff] %v395
        %412 = vst [vmem:[%s191 + $0x10] sm:$0xff] %v396
        %413 = vst [vmem:[%s191 + $0x18] sm:$0xff] %v397
        %414 = vst [vmem:[%s191 + $0x20] sm:$0xff] %v398
        %415 = vst [vmem:[%s191 + $0x28] sm:$0xff] %v399
        %416 = vst [vmem:[%s191 + $0x30] sm:$0xff] %v400
        %417 = vst [vmem:[%s191 + $0x38] sm:$0xff] %v401
        %418 = vst [vmem:[%s191 + $0x40] sm:$0xff] %v402
        %419 = vst [vmem:[%s191 + $0x48] sm:$0xff] %v403
        %420 = vst [vmem:[%s191 + $0x50] sm:$0xff] %v404
        %421 = vst [vmem:[%s191 + $0x58] sm:$0xff] %v405
        %422 = vst [vmem:[%s191 + $0x60] sm:$0xff] %v406
        %423 = vst [vmem:[%s191 + $0x68] sm:$0xff] %v407
        %424 = vst [vmem:[%s191 + $0x70] sm:$0xff] %v408
        %425 = vst [vmem:[%s191 + $0x78] sm:$0xff] %v409
        %s426 = sand.u32 %s115, 1
        %s427 = scalar_lea.sflag [#allocation3], %s426
        %s428 = sand.u32 %s115, 1
        %s429 = smul.addr %s428, 128
        %s430 = scalar_lea.vmem [#allocation2], %s429
        // Predicated region
        $region37: #{tpu_custom_call.1} parent=35 // pred_check
          %p431 = pneg %p125
        $region38: #{tpu_custom_call.1} parent=35 // pred_check_branch
          %433 = sbr.rel (%p431) target = $region40
        $region39: #{tpu_custom_call.1} parent=35 // pred_region
          %s434 = smul.u32 16, %s18
          %436 = vsyncadd %s427, 0
          %s437 = smul.addr %s434, 8
          %s438 = scalar_lea.hbm %s4, %s437
          %s439 = sshll.u32 %s430, 4
          %s440 = int_to_ptr.vmem [resolvable:$true] %s439
          %s441 = sshll.u32 %s438, 4
          %s442 = int_to_ptr.hbm [resolvable:$true] %s441
          %447 = dma.vmem_to_hbm [thread:$0]  %s440, 2048, %s442, %s427, 128, 128, 8
        $region40: #{tpu_custom_call.1} parent=35 // pred_fallthru
          _
      $region36: #{tpu_custom_call.1} parent=5 // pred_fallthru
        _
      %p448 = scmp.le.s32.totalorder 2, %s13
      // Predicated region
      $region41: #{tpu_custom_call.1} parent=5 // pred_check
        %p449 = pneg %p448
      $region42: #{tpu_custom_call.1} parent=5 // pred_check_branch
        %451 = sbr.rel (%p449) target = $region44
      $region43: #{tpu_custom_call.1} parent=5 // pred_region
        %s452 = ssub.s32 %s13, 2
        // Predicated region
        $region45: #{tpu_custom_call.1} parent=43 // pred_check
          %p453 = pneg %p131
        $region46: #{tpu_custom_call.1} parent=43 // pred_check_branch
          %455 = sbr.rel (%p453) target = $region48
        $region47: #{tpu_custom_call.1} parent=43 // pred_region
          %s456 = sand.u32 %s116, 1
          %s457 = scalar_lea.sflag [#allocation3], %s456
          %s458 = sand.u32 %s116, 1
          %s459 = smul.addr %s458, 128
          %s460 = scalar_lea.vmem [#allocation2], %s459
          %462 = dma.done %s457, 2048
        $region48: #{tpu_custom_call.1} parent=43 // pred_fallthru
          _
      $region44: #{tpu_custom_call.1} parent=5 // pred_fallthru
        _
    $region6: #{tpu_custom_call.1} parent=1 // loop_footer
      %s17 = sadd.s32 1, %s13
    $region7: #{tpu_custom_call.1} parent=1 // loop_footer_branch
      %12 = sbr.rel target = $region3
    $region8: #{tpu_custom_call.1} parent=1 // loop_exit
      _
    %463 = vsyncpa [#allocation3], 1
    %s464 = scalar_lea.sflag [#allocation3], 1
    %465 = vsyncpa %s464, 1

</llo_original>
